<compile_context>
chip_gen: v6e
topology: v6e:2x2x1
jax: 0.10.0
libtpu: 0.0.40
codegen_flags: <defaults>
</compile_context>

<pallas_src>
import functools

import jax
import jax.numpy as jnp
from jax.experimental import pallas as pl
from jax.experimental.pallas import tpu as pltpu

LANE = 128
SUBLANE = 8
HIDDEN = 64


def _round_up(x, m):
    return ((x + m - 1) // m) * m


def dqn_kernel(x_ref, w1_ref, b1_ref, w2_ref, b2_ref, w3_ref, b3_ref, o_ref):
    # Cast the (narrow, f32) input tile to bf16 for the MXU; accumulate in f32.
    x = x_ref[...].astype(jnp.bfloat16)
    # fc1 + relu
    h1 = jnp.dot(x, w1_ref[...], preferred_element_type=jnp.float32)
    h1 = jnp.maximum(h1 + b1_ref[...], 0.0)
    # fc2 + relu
    h2 = jnp.dot(h1.astype(jnp.bfloat16), w2_ref[...],
                 preferred_element_type=jnp.float32)
    h2 = jnp.maximum(h2 + b2_ref[...], 0.0)
    # fc3 (no activation) — narrow [tb, action_dim] output written directly.
    out = jnp.dot(h2.astype(jnp.bfloat16), w3_ref[...],
                  preferred_element_type=jnp.float32)
    o_ref[...] = (out + b3_ref[...]).astype(o_ref.dtype)


def init_params(key, state_dim, action_dim):
    """nn.Linear-style init: U(-1/sqrt(fan_in), 1/sqrt(fan_in)).
    Weights stored [in_features, out_features] (transpose of PyTorch layout)."""
    dims = [(state_dim, HIDDEN), (HIDDEN, HIDDEN), (HIDDEN, action_dim)]
    params = {}
    keys = jax.random.split(key, 2 * len(dims))
    for i, (fan_in, fan_out) in enumerate(dims):
        bound = 1.0 / jnp.sqrt(jnp.float32(fan_in))
        params[f"w{i+1}"] = jax.random.uniform(
            keys[2 * i], (fan_in, fan_out), jnp.float32, -bound, bound)
        params[f"b{i+1}"] = jax.random.uniform(
            keys[2 * i + 1], (1, fan_out), jnp.float32, -bound, bound)
    return params


def pack_params(params):
    """Pad only the hidden feature dim to 128 lanes (zero pads are exact through
    matmul + ReLU). w1 keeps un-padded input rows; w3/b3 keep un-padded output
    columns. Weights -> bf16 (matmul operands), biases -> f32 (epilogue)."""
    h_pad = _round_up(HIDDEN, LANE)

    def pad_cols(a, cols):
        return jnp.zeros((a.shape[0], cols), a.dtype).at[:, :a.shape[1]].set(a)

    def pad_rows(a, rows):
        return jnp.zeros((rows, a.shape[1]), a.dtype).at[:a.shape[0], :].set(a)

    return dict(
        w1=pad_cols(params["w1"], h_pad).astype(jnp.bfloat16),   # [state_dim, 128]
        b1=pad_cols(params["b1"], h_pad).astype(jnp.float32),    # [1, 128]
        w2=pad_rows(pad_cols(params["w2"], h_pad), h_pad).astype(jnp.bfloat16),  # [128, 128]
        b2=pad_cols(params["b2"], h_pad).astype(jnp.float32),    # [1, 128]
        w3=pad_rows(params["w3"], h_pad).astype(jnp.bfloat16),   # [128, action_dim]
        b3=params["b3"].astype(jnp.float32),                     # [1, action_dim]
    )


@functools.partial(jax.jit, static_argnames=("tile_b",))
def dqn_forward(x, packed, *, tile_b=2048):
    """x: [B, state_dim] f32. packed: output of pack_params.
    Returns [B, action_dim] f32."""
    B, state_dim = x.shape
    action_dim = packed["w3"].shape[1]

    # Row tile: large enough to amortize the ~0.35us/step overhead and make each
    # DMA big, but never collapse to a single step for large B so the "parallel"
    # batch axis can split across v7x's two TensorCores.
    tb = min(tile_b, _round_up(max(-(-B // 2), 1), SUBLANE))
    grid = pl.cdiv(B, tb)  # ragged last block: OOB reads feed masked-off rows only

    const = lambda shape: pl.BlockSpec(shape, lambda i: (0, 0))  # VMEM-resident

    return pl.pallas_call(
        dqn_kernel,
        out_shape=jax.ShapeDtypeStruct((B, action_dim), jnp.float32),
        grid=(grid,),
        in_specs=[
            pl.BlockSpec((tb, state_dim), lambda i: (i, 0)),      # x tile (un-padded lanes)
            const(packed["w1"].shape), const(packed["b1"].shape),
            const(packed["w2"].shape), const(packed["b2"].shape),
            const(packed["w3"].shape), const(packed["b3"].shape),
        ],
        out_specs=pl.BlockSpec((tb, action_dim), lambda i: (i, 0)),  # narrow output
        compiler_params=pltpu.CompilerParams(
            dimension_semantics=("parallel",)),
    )(x, packed["w1"], packed["b1"], packed["w2"], packed["b2"],
      packed["w3"], packed["b3"])


def dqn_reference(x, params):
    """Plain-JAX f32 reference for correctness checking."""
    h = jnp.maximum(x @ params["w1"] + params["b1"], 0.0)
    h = jnp.maximum(h @ params["w2"] + params["b2"], 0.0)
    return h @ params["w3"] + params["b3"]


if __name__ == "__main__":
    key = jax.random.PRNGKey(0)
    k_param, k_x1, k_x2 = jax.random.split(key, 3)

    state_dim, action_dim = 8, 4
    params = init_params(k_param, state_dim, action_dim)
    packed = pack_params(params)

    # Small batch (single grid step).
    x_small = jax.random.normal(k_x1, (8, state_dim), jnp.float32)
    out_small = jax.block_until_ready(dqn_forward(x_small, packed))
    ref_small = dqn_reference(x_small, params)
    assert out_small.shape == (8, action_dim)
    # NOTE: bf16 matmul operands (f32 accumulation) => ~1e-2 relative deviation
    # from the f32 reference; fine for DQN inference.
    assert jnp.allclose(out_small, ref_small, atol=5e-2, rtol=5e-2)

    # Non-multiple batch (exercises 2-step parallel grid + ragged last block).
    x_big = jax.random.normal(k_x2, (300, state_dim), jnp.float32)
    out_big = jax.block_until_ready(dqn_forward(x_big, packed))
    ref_big = dqn_reference(x_big, params)
    assert out_big.shape == (300, action_dim)
    assert jnp.allclose(out_big, ref_big, atol=5e-2, rtol=5e-2)

    print("KERNEL_OK")
</pallas_src>

<mosaic_0001>
module attributes {stable_mosaic.version = 11 : i64} {
  func.func @dqn_kernel(%arg0: i32, %arg1: memref<8x8xf32, #tpu.memory_space<vmem>>, %arg2: memref<8x128xbf16, #tpu.memory_space<vmem>>, %arg3: memref<1x128xf32, #tpu.memory_space<vmem>>, %arg4: memref<128x128xbf16, #tpu.memory_space<vmem>>, %arg5: memref<1x128xf32, #tpu.memory_space<vmem>>, %arg6: memref<128x4xbf16, #tpu.memory_space<vmem>>, %arg7: memref<1x4xf32, #tpu.memory_space<vmem>>, %arg8: memref<8x4xf32, #tpu.memory_space<vmem>>) attributes {dimension_semantics = [#tpu.dimension_semantics<parallel>], iteration_bounds = array<i64: 1>, scalar_prefetch = 0 : i64, scratch_operands = 0 : i64, tpu.core_type = #tpu.core_type<tc>, window_params = [{transform_indices = @transform_0, window_bounds = array<i64: 8, 8>}, {pipeline_mode = #tpu.pipeline_mode<synchronous>, transform_indices = @transform_1, window_bounds = array<i64: 8, 128>}, {pipeline_mode = #tpu.pipeline_mode<synchronous>, transform_indices = @transform_2, window_bounds = array<i64: 1, 128>}, {pipeline_mode = #tpu.pipeline_mode<synchronous>, transform_indices = @transform_3, window_bounds = array<i64: 128, 128>}, {pipeline_mode = #tpu.pipeline_mode<synchronous>, transform_indices = @transform_4, window_bounds = array<i64: 1, 128>}, {pipeline_mode = #tpu.pipeline_mode<synchronous>, transform_indices = @transform_5, window_bounds = array<i64: 128, 4>}, {pipeline_mode = #tpu.pipeline_mode<synchronous>, transform_indices = @transform_6, window_bounds = array<i64: 1, 4>}, {transform_indices = @transform_7, window_bounds = array<i64: 8, 4>}]} {
    %c0 = arith.constant 0 : index
    %c0_0 = arith.constant 0 : index
    %0 = vector.load %arg1[%c0, %c0_0] : memref<8x8xf32, #tpu.memory_space<vmem>>, vector<8x8xf32>
    %1 = arith.truncf %0 : vector<8x8xf32> to vector<8x8xbf16>
    %c0_1 = arith.constant 0 : index
    %c0_2 = arith.constant 0 : index
    %2 = vector.load %arg2[%c0_1, %c0_2] : memref<8x128xbf16, #tpu.memory_space<vmem>>, vector<8x128xbf16>
    %cst = arith.constant dense<0.000000e+00> : vector<8x128xf32>
    %3 = tpu.matmul %1, %2, %cst {dimension_numbers = #tpu.dot_dimension_numbers<[1], [0], [0], [1], [0, 0, 1, 1], [], []>} : vector<8x8xbf16>, vector<8x128xbf16>, vector<8x128xf32> -> vector<8x128xf32>
    %c0_3 = arith.constant 0 : index
    %c0_4 = arith.constant 0 : index
    %4 = vector.load %arg3[%c0_3, %c0_4] : memref<1x128xf32, #tpu.memory_space<vmem>>, vector<1x128xf32>
    %5 = vector.broadcast %4 : vector<1x128xf32> to vector<8x128xf32>
    %6 = arith.addf %3, %5 : vector<8x128xf32>
    %cst_5 = arith.constant 0.000000e+00 : f32
    %7 = vector.broadcast %cst_5 : f32 to vector<8x128xf32>
    %8 = arith.maximumf %6, %7 : vector<8x128xf32>
    %9 = arith.truncf %8 : vector<8x128xf32> to vector<8x128xbf16>
    %c0_6 = arith.constant 0 : index
    %c0_7 = arith.constant 0 : index
    %10 = vector.load %arg4[%c0_6, %c0_7] : memref<128x128xbf16, #tpu.memory_space<vmem>>, vector<128x128xbf16>
    %cst_8 = arith.constant dense<0.000000e+00> : vector<8x128xf32>
    %11 = tpu.matmul %9, %10, %cst_8 {dimension_numbers = #tpu.dot_dimension_numbers<[1], [0], [0], [1], [0, 0, 1, 1], [], []>} : vector<8x128xbf16>, vector<128x128xbf16>, vector<8x128xf32> -> vector<8x128xf32>
    %c0_9 = arith.constant 0 : index
    %c0_10 = arith.constant 0 : index
    %12 = vector.load %arg5[%c0_9, %c0_10] : memref<1x128xf32, #tpu.memory_space<vmem>>, vector<1x128xf32>
    %13 = vector.broadcast %12 : vector<1x128xf32> to vector<8x128xf32>
    %14 = arith.addf %11, %13 : vector<8x128xf32>
    %cst_11 = arith.constant 0.000000e+00 : f32
    %15 = vector.broadcast %cst_11 : f32 to vector<8x128xf32>
    %16 = arith.maximumf %14, %15 : vector<8x128xf32>
    %17 = arith.truncf %16 : vector<8x128xf32> to vector<8x128xbf16>
    %c0_12 = arith.constant 0 : index
    %c0_13 = arith.constant 0 : index
    %18 = vector.load %arg6[%c0_12, %c0_13] : memref<128x4xbf16, #tpu.memory_space<vmem>>, vector<128x4xbf16>
    %cst_14 = arith.constant dense<0.000000e+00> : vector<8x4xf32>
    %19 = tpu.matmul %17, %18, %cst_14 {dimension_numbers = #tpu.dot_dimension_numbers<[1], [0], [0], [1], [0, 0, 1, 1], [], []>} : vector<8x128xbf16>, vector<128x4xbf16>, vector<8x4xf32> -> vector<8x4xf32>
    %c0_15 = arith.constant 0 : index
    %c0_16 = arith.constant 0 : index
    %20 = vector.load %arg7[%c0_15, %c0_16] : memref<1x4xf32, #tpu.memory_space<vmem>>, vector<1x4xf32>
    %21 = vector.broadcast %20 : vector<1x4xf32> to vector<8x4xf32>
    %22 = arith.addf %19, %21 : vector<8x4xf32>
    %c0_17 = arith.constant 0 : index
    %c0_18 = arith.constant 0 : index
    %23 = vector.load %arg8[%c0_17, %c0_18] : memref<8x4xf32, #tpu.memory_space<vmem>>, vector<8x4xf32>
    tpu.vector_store %arg8[%c0_17, %c0_18], %22 {strides = array<i32>} : memref<8x4xf32, #tpu.memory_space<vmem>>, vector<8x4xf32>,
    return
  }
  func.func @transform_0(%arg0: i32) -> (i32, i32) {
    %c0_i32 = arith.constant 0 : i32
    %c0_i32_0 = arith.constant 0 : i32
    return %arg0, %c0_i32 : i32, i32
  }
  func.func @transform_1(%arg0: i32) -> (i32, i32) {
    %c0_i32 = arith.constant 0 : i32
    %c0_i32_0 = arith.constant 0 : i32
    %c0_i32_1 = arith.constant 0 : i32
    return %c0_i32, %c0_i32_0 : i32, i32
  }
  func.func @transform_2(%arg0: i32) -> (i32, i32) {
    %c0_i32 = arith.constant 0 : i32
    %c0_i32_0 = arith.constant 0 : i32
    %c0_i32_1 = arith.constant 0 : i32
    return %c0_i32, %c0_i32_0 : i32, i32
  }
  func.func @transform_3(%arg0: i32) -> (i32, i32) {
    %c0_i32 = arith.constant 0 : i32
    %c0_i32_0 = arith.constant 0 : i32
    %c0_i32_1 = arith.constant 0 : i32
    return %c0_i32, %c0_i32_0 : i32, i32
  }
  func.func @transform_4(%arg0: i32) -> (i32, i32) {
    %c0_i32 = arith.constant 0 : i32
    %c0_i32_0 = arith.constant 0 : i32
    %c0_i32_1 = arith.constant 0 : i32
    return %c0_i32, %c0_i32_0 : i32, i32
  }
  func.func @transform_5(%arg0: i32) -> (i32, i32) {
    %c0_i32 = arith.constant 0 : i32
    %c0_i32_0 = arith.constant 0 : i32
    %c0_i32_1 = arith.constant 0 : i32
    return %c0_i32, %c0_i32_0 : i32, i32
  }
  func.func @transform_6(%arg0: i32) -> (i32, i32) {
    %c0_i32 = arith.constant 0 : i32
    %c0_i32_0 = arith.constant 0 : i32
    %c0_i32_1 = arith.constant 0 : i32
    return %c0_i32, %c0_i32_0 : i32, i32
  }
  func.func @transform_7(%arg0: i32) -> (i32, i32) {
    %c0_i32 = arith.constant 0 : i32
    %c0_i32_0 = arith.constant 0 : i32
    return %arg0, %c0_i32 : i32, i32
  }
}

</mosaic_0001>

<llo_original>
// kernel: dqn_forward.1
$region0: #{dqn_forward.1}
  #allocation0 [shape = 'u32[]', space=smem, size = 0x4, offset = 0x4, fixed_abs, tag = 'smem constant byte address 0x4 - core index']
  #allocation1 [shape = 'u32[144,128]{1,0:T(1,128)}', space=vmem, size = 0x12000, scoped, tag = 'internal scratch']
  %s0 = inlined_call_operand.vmem [shape: f32[8,8], index: 0, kind: input, shape index: {}]
  %s1 = inlined_call_operand.hbm [shape: bf16[8,128], index: 1, kind: input, shape index: {}]
  %s2 = inlined_call_operand.vmem [shape: f32[1,128], index: 2, kind: input, shape index: {}]
  %s3 = inlined_call_operand.vmem [shape: bf16[128,128], index: 3, kind: input, shape index: {}]
  %s4 = inlined_call_operand.vmem [shape: f32[1,128], index: 4, kind: input, shape index: {}]
  %s5 = inlined_call_operand.vmem [shape: bf16[128,4], index: 5, kind: input, shape index: {}]
  %s6 = inlined_call_operand.hbm [shape: f32[1,4], index: 6, kind: input, shape index: {}]
  %s7 = inlined_call_operand.vmem [shape: f32[8,4], index: 7, kind: output, shape index: {}]
  %s8 = sld [smem:[#allocation0]]
  $region46: #{dqn_forward.1} parent=0
    _
  %s10 = ssub.s32 1, %s8
  %s11 = scalar_select 0, %s10, %s8
  $region1: #{dqn_forward.1} parent=0
    #allocation2 [shape = 'u8[2048]{0}', space=vmem, size = 0x800, scoped, tag = 'input window, operand 1, single buffered']
    #allocation3 [shape = 's32[1]{0}', space=sflag, size = 0x4, scoped, tag = 'scoped memory for dqn_forward.1']
    #allocation4 [shape = 'u8[512]{0}', space=vmem, size = 0x400, scoped, tag = 'input window, operand 6, single buffered']
    #allocation5 [shape = 's32[1]{0}', space=sflag, size = 0x4, scoped, tag = 'scoped memory for dqn_forward.1']
    %12 = vsyncpa [#allocation3], 0
    %13 = vsyncpa [#allocation5], 0
    // Predicated region
    $region2: #{dqn_forward.1} parent=1 // pred_check
      _
    $region3: #{dqn_forward.1} parent=1 // pred_check_branch
      %15 = sbr.rel (0) target = $region5
    $region4: #{dqn_forward.1} parent=1 // pred_region
      _
    $region5: #{dqn_forward.1} parent=1 // pred_fallthru
      _
    // Predicated region
    $region6: #{dqn_forward.1} parent=1 // pred_check
      _
    $region7: #{dqn_forward.1} parent=1 // pred_check_branch
      %17 = sbr.rel (0) target = $region9
    $region8: #{dqn_forward.1} parent=1 // pred_region
      %s19 = ssub.s32 64, 64
      %20 = vsyncadd [#allocation3], %s19
      %s22 = sshll.u32 [#allocation2], 4
      %s23 = int_to_ptr.vmem [resolvable:$true] %s22
      %25 = dma.hbm_to_vmem [thread:$0]  %s1, 64, %s23, [#allocation3]
    $region9: #{dqn_forward.1} parent=1 // pred_fallthru
      _
    // Predicated region
    $region10: #{dqn_forward.1} parent=1 // pred_check
      _
    $region11: #{dqn_forward.1} parent=1 // pred_check_branch
      %27 = sbr.rel (0) target = $region13
    $region12: #{dqn_forward.1} parent=1 // pred_region
      _
    $region13: #{dqn_forward.1} parent=1 // pred_fallthru
      _
    // Predicated region
    $region14: #{dqn_forward.1} parent=1 // pred_check
      _
    $region15: #{dqn_forward.1} parent=1 // pred_check_branch
      %29 = sbr.rel (0) target = $region17
    $region16: #{dqn_forward.1} parent=1 // pred_region
      _
    $region17: #{dqn_forward.1} parent=1 // pred_fallthru
      _
    // Predicated region
    $region18: #{dqn_forward.1} parent=1 // pred_check
      _
    $region19: #{dqn_forward.1} parent=1 // pred_check_branch
      %31 = sbr.rel (0) target = $region21
    $region20: #{dqn_forward.1} parent=1 // pred_region
      _
    $region21: #{dqn_forward.1} parent=1 // pred_fallthru
      _
    // Predicated region
    $region22: #{dqn_forward.1} parent=1 // pred_check
      _
    $region23: #{dqn_forward.1} parent=1 // pred_check_branch
      %33 = sbr.rel (0) target = $region25
    $region24: #{dqn_forward.1} parent=1 // pred_region
      _
    $region25: #{dqn_forward.1} parent=1 // pred_fallthru
      _
    // Predicated region
    $region26: #{dqn_forward.1} parent=1 // pred_check
      _
    $region27: #{dqn_forward.1} parent=1 // pred_check_branch
      %35 = sbr.rel (0) target = $region29
    $region28: #{dqn_forward.1} parent=1 // pred_region
      %s37 = ssub.s32 16, 16
      %38 = vsyncadd [#allocation5], %s37
      %s40 = sshll.u32 [#allocation4], 4
      %s41 = int_to_ptr.vmem [resolvable:$true] %s40
      %43 = dma.hbm_to_vmem [thread:$0]  %s6, 16, %s41, [#allocation5]
    $region29: #{dqn_forward.1} parent=1 // pred_fallthru
      _
    // Predicated region
    $region30: #{dqn_forward.1} parent=1 // pred_check
      _
    $region31: #{dqn_forward.1} parent=1 // pred_check_branch
      %45 = sbr.rel (0) target = $region33
    $region32: #{dqn_forward.1} parent=1 // pred_region
      %46 = dma.done [#allocation3], 64
    $region33: #{dqn_forward.1} parent=1 // pred_fallthru
      _
    // Predicated region
    $region34: #{dqn_forward.1} parent=1 // pred_check
      _
    $region35: #{dqn_forward.1} parent=1 // pred_check_branch
      %48 = sbr.rel (0) target = $region37
    $region36: #{dqn_forward.1} parent=1 // pred_region
      %49 = dma.done [#allocation5], 16
    $region37: #{dqn_forward.1} parent=1 // pred_fallthru
      _
    %v51 = vld [vmem:[%s0] sm:$0xff]
    %v52 = vpack.c.bf16 %v51, %v51
    %v53 = vld [vmem:[#allocation2] sm:$0xf]
    %v54 = vld [vmem:[%s2] sm:$0x1]
    %v56 = vlaneseq
    %v57 = vshrl.u32 %v56, 7
    %v58 = vsub.s32 0, %v57
    %v59 = vrot.slane %v54, %v58
    %vm61 = vcmask 64512
    %v63 = vsel %vm61, %v52, 0
    %vm65 = vcmask 1043456
    %v67 = vsel %vm65, %v53, 0
    %69 = vmatprep.subr.bf16.mxu0 0
    %70 = vmatpush1.bf16.msra.mxu0 0
    %71 = vmatprep.subr.bf16.mxu0 0
    %72 = vmatpush1.bf16.msra.mxu0 0
    %73 = vmatprep.subr.bf16.mxu0 0
    %74 = vmatpush1.bf16.msra.mxu0 0
    %75 = vmatprep.subr.bf16.mxu0 0
    %76 = vmatpush1.bf16.msra.mxu0 0
    %77 = vmatprep.subr.bf16.mxu0 0
    %78 = vmatpush1.bf16.msra.mxu0 0
    %79 = vmatprep.subr.bf16.mxu0 0
    %80 = vmatpush1.bf16.msra.mxu0 0
    %81 = vmatprep.subr.bf16.mxu0 0
    %82 = vmatpush1.bf16.msra.mxu0 0
    %83 = vmatprep.subr.bf16.mxu0 0
    %84 = vmatpush1.bf16.msra.mxu0 %v67
    %85 = vmatprep.subr.bf16.mxu0 0
    %86 = vmatpush2.bf16.msra.mxu0 0
    %87 = vmatprep.subr.bf16.mxu0 0
    %88 = vmatpush2.bf16.msra.mxu0 0
    %89 = vmatprep.subr.bf16.mxu0 0
    %90 = vmatpush2.bf16.msra.mxu0 0
    %91 = vmatprep.subr.bf16.mxu0 0
    %92 = vmatpush2.bf16.msra.mxu0 0
    %93 = vmatprep.subr.bf16.mxu0 0
    %94 = vmatpush2.bf16.msra.mxu0 0
    %95 = vmatprep.subr.bf16.mxu0 0
    %96 = vmatpush2.bf16.msra.mxu0 0
    %97 = vmatprep.subr.bf16.mxu0 0
    %98 = vmatpush2.bf16.msra.mxu0 0
    %99 = vmatprep.subr.bf16.mxu0 0
    %100 = vmatpush2.bf16.msra.mxu0 0
    %101 = vmatprep.mubr.bf16.mxu0 0
    %102 = vmatmul.mubr.bf16.gmra.mxu0 %v63
    %v103 = vpop.f32.mrf.mxu0
    %v104 = vadd.f32 %v59, %v103
    %v105 = vpop.f32.mrf.mxu0
    %v106 = vpop.f32.mrf.mxu0
    %v107 = vpop.f32.mrf.mxu0
    %108 = vdwg.mxu0
    %v109 = vmax.f32 %v104, 0.0
    %v110 = vpack.c.bf16 %v109, %v109
    %v111 = vld [vmem:[%s3] sm:$0xf]
    %v112 = vld [vmem:[%s3 + $0x4] sm:$0xf]
    %v113 = vld [vmem:[%s3 + $0x8] sm:$0xf]
    %v114 = vld [vmem:[%s3 + $0xc] sm:$0xf]
    %v115 = vld [vmem:[%s3 + $0x10] sm:$0xf]
    %v116 = vld [vmem:[%s3 + $0x14] sm:$0xf]
    %v117 = vld [vmem:[%s3 + $0x18] sm:$0xf]
    %v118 = vld [vmem:[%s3 + $0x1c] sm:$0xf]
    %v119 = vld [vmem:[%s3 + $0x20] sm:$0xf]
    %v120 = vld [vmem:[%s3 + $0x24] sm:$0xf]
    %v121 = vld [vmem:[%s3 + $0x28] sm:$0xf]
    %v122 = vld [vmem:[%s3 + $0x2c] sm:$0xf]
    %v123 = vld [vmem:[%s3 + $0x30] sm:$0xf]
    %v124 = vld [vmem:[%s3 + $0x34] sm:$0xf]
    %v125 = vld [vmem:[%s3 + $0x38] sm:$0xf]
    %v126 = vld [vmem:[%s3 + $0x3c] sm:$0xf]
    %v127 = vld [vmem:[%s4] sm:$0x1]
    %v129 = vlaneseq
    %v130 = vshrl.u32 %v129, 7
    %v131 = vsub.s32 0, %v130
    %v132 = vrot.slane %v127, %v131
    %v150 = vunpack.c.l.b16 %v111
    %v151 = vunpack.c.l.b16 %v112
    %v152 = vunpack.c.l.b16 %v113
    %v153 = vunpack.c.l.b16 %v114
    %v154 = vunpack.c.l.b16 %v115
    %v155 = vunpack.c.l.b16 %v116
    %v156 = vunpack.c.l.b16 %v117
    %v157 = vunpack.c.l.b16 %v118
    %v158 = vunpack.c.l.b16 %v119
    %v159 = vunpack.c.l.b16 %v120
    %v160 = vunpack.c.l.b16 %v121
    %v161 = vunpack.c.l.b16 %v122
    %v162 = vunpack.c.l.b16 %v123
    %v163 = vunpack.c.l.b16 %v124
    %v164 = vunpack.c.l.b16 %v125
    %v165 = vunpack.c.l.b16 %v126
    %v166 = vpack.c.b16 %v151, %v150
    %v167 = vpack.c.b16 %v153, %v152
    %v168 = vpack.c.b16 %v155, %v154
    %v169 = vpack.c.b16 %v157, %v156
    %v170 = vpack.c.b16 %v159, %v158
    %v171 = vpack.c.b16 %v161, %v160
    %v172 = vpack.c.b16 %v163, %v162
    %v173 = vpack.c.b16 %v165, %v164
    %182 = vmatprep.subr.bf16.mxu0 0
    %183 = vmatpush1.bf16.msra.mxu0 %v173
    %184 = vmatprep.subr.bf16.mxu0 0
    %185 = vmatpush1.bf16.msra.mxu0 %v172
    %186 = vmatprep.subr.bf16.mxu0 0
    %187 = vmatpush1.bf16.msra.mxu0 %v171
    %188 = vmatprep.subr.bf16.mxu0 0
    %189 = vmatpush1.bf16.msra.mxu0 %v170
    %190 = vmatprep.subr.bf16.mxu0 0
    %191 = vmatpush1.bf16.msra.mxu0 %v169
    %192 = vmatprep.subr.bf16.mxu0 0
    %193 = vmatpush1.bf16.msra.mxu0 %v168
    %194 = vmatprep.subr.bf16.mxu0 0
    %195 = vmatpush1.bf16.msra.mxu0 %v167
    %196 = vmatprep.subr.bf16.mxu0 0
    %197 = vmatpush1.bf16.msra.mxu0 %v166
    %198 = vmatprep.subr.bf16.mxu0 0
    %199 = vmatpush2.bf16.msra.mxu0 0
    %200 = vmatprep.subr.bf16.mxu0 0
    %201 = vmatpush2.bf16.msra.mxu0 0
    %202 = vmatprep.subr.bf16.mxu0 0
    %203 = vmatpush2.bf16.msra.mxu0 0
    %204 = vmatprep.subr.bf16.mxu0 0
    %205 = vmatpush2.bf16.msra.mxu0 0
    %206 = vmatprep.subr.bf16.mxu0 0
    %207 = vmatpush2.bf16.msra.mxu0 0
    %208 = vmatprep.subr.bf16.mxu0 0
    %209 = vmatpush2.bf16.msra.mxu0 0
    %210 = vmatprep.subr.bf16.mxu0 0
    %211 = vmatpush2.bf16.msra.mxu0 0
    %212 = vmatprep.subr.bf16.mxu0 0
    %213 = vmatpush2.bf16.msra.mxu0 0
    %214 = vmatprep.mubr.bf16.mxu0 0
    %215 = vmatmul.mubr.bf16.gmra.mxu0 %v110
    %v216 = vpop.f32.mrf.mxu0
    %v217 = vadd.f32 %v132, %v216
    %v218 = vpop.f32.mrf.mxu0
    %v219 = vpop.f32.mrf.mxu0
    %v220 = vpop.f32.mrf.mxu0
    %221 = vdwg.mxu0
    %v222 = vmax.f32 %v217, 0.0
    %v223 = vpack.c.bf16 %v222, %v222
    %v224 = vld [vmem:[%s5] sm:$0xf]
    %v225 = vld [vmem:[%s5 + $0x4] sm:$0xf]
    %v226 = vld [vmem:[%s5 + $0x8] sm:$0xf]
    %v227 = vld [vmem:[%s5 + $0xc] sm:$0xf]
    %v228 = vld [vmem:[%s5 + $0x10] sm:$0xf]
    %v229 = vld [vmem:[%s5 + $0x14] sm:$0xf]
    %v230 = vld [vmem:[%s5 + $0x18] sm:$0xf]
    %v231 = vld [vmem:[%s5 + $0x1c] sm:$0xf]
    %v232 = vld [vmem:[%s5 + $0x20] sm:$0xf]
    %v233 = vld [vmem:[%s5 + $0x24] sm:$0xf]
    %v234 = vld [vmem:[%s5 + $0x28] sm:$0xf]
    %v235 = vld [vmem:[%s5 + $0x2c] sm:$0xf]
    %v236 = vld [vmem:[%s5 + $0x30] sm:$0xf]
    %v237 = vld [vmem:[%s5 + $0x34] sm:$0xf]
    %v238 = vld [vmem:[%s5 + $0x38] sm:$0xf]
    %v239 = vld [vmem:[%s5 + $0x3c] sm:$0xf]
    %v240 = vld [vmem:[#allocation4] sm:$0x1]
    %v242 = vlaneseq
    %v243 = vshrl.u32 %v242, 7
    %v244 = vsub.s32 0, %v243
    %v245 = vrot.slane %v240, %v244
    %v263 = vunpack.c.l.b16 %v224
    %v264 = vunpack.c.l.b16 %v225
    %v265 = vunpack.c.l.b16 %v226
    %v266 = vunpack.c.l.b16 %v227
    %v267 = vunpack.c.l.b16 %v228
    %v268 = vunpack.c.l.b16 %v229
    %v269 = vunpack.c.l.b16 %v230
    %v270 = vunpack.c.l.b16 %v231
    %v271 = vunpack.c.l.b16 %v232
    %v272 = vunpack.c.l.b16 %v233
    %v273 = vunpack.c.l.b16 %v234
    %v274 = vunpack.c.l.b16 %v235
    %v275 = vunpack.c.l.b16 %v236
    %v276 = vunpack.c.l.b16 %v237
    %v277 = vunpack.c.l.b16 %v238
    %v278 = vunpack.c.l.b16 %v239
    %v279 = vpack.c.b16 %v264, %v263
    %v280 = vpack.c.b16 %v266, %v265
    %v281 = vpack.c.b16 %v268, %v267
    %v282 = vpack.c.b16 %v270, %v269
    %v283 = vpack.c.b16 %v272, %v271
    %v284 = vpack.c.b16 %v274, %v273
    %v285 = vpack.c.b16 %v276, %v275
    %v286 = vpack.c.b16 %v278, %v277
    %295 = vmatprep.subr.bf16.mxu0 0
    %296 = vmatpush1.bf16.msra.mxu0 %v286
    %297 = vmatprep.subr.bf16.mxu0 0
    %298 = vmatpush1.bf16.msra.mxu0 %v285
    %299 = vmatprep.subr.bf16.mxu0 0
    %300 = vmatpush1.bf16.msra.mxu0 %v284
    %301 = vmatprep.subr.bf16.mxu0 0
    %302 = vmatpush1.bf16.msra.mxu0 %v283
    %303 = vmatprep.subr.bf16.mxu0 0
    %304 = vmatpush1.bf16.msra.mxu0 %v282
    %305 = vmatprep.subr.bf16.mxu0 0
    %306 = vmatpush1.bf16.msra.mxu0 %v281
    %307 = vmatprep.subr.bf16.mxu0 0
    %308 = vmatpush1.bf16.msra.mxu0 %v280
    %309 = vmatprep.subr.bf16.mxu0 0
    %310 = vmatpush1.bf16.msra.mxu0 %v279
    %311 = vmatprep.subr.bf16.mxu0 0
    %312 = vmatpush2.bf16.msra.mxu0 0
    %313 = vmatprep.subr.bf16.mxu0 0
    %314 = vmatpush2.bf16.msra.mxu0 0
    %315 = vmatprep.subr.bf16.mxu0 0
    %316 = vmatpush2.bf16.msra.mxu0 0
    %317 = vmatprep.subr.bf16.mxu0 0
    %318 = vmatpush2.bf16.msra.mxu0 0
    %319 = vmatprep.subr.bf16.mxu0 0
    %320 = vmatpush2.bf16.msra.mxu0 0
    %321 = vmatprep.subr.bf16.mxu0 0
    %322 = vmatpush2.bf16.msra.mxu0 0
    %323 = vmatprep.subr.bf16.mxu0 0
    %324 = vmatpush2.bf16.msra.mxu0 0
    %325 = vmatprep.subr.bf16.mxu0 0
    %326 = vmatpush2.bf16.msra.mxu0 0
    %327 = vmatprep.mubr.bf16.mxu0 0
    %328 = vmatmul.mubr.bf16.gmra.mxu0 %v223
    %v329 = vpop.f32.mrf.mxu0
    %v330 = vadd.f32 %v245, %v329
    %v331 = vpop.f32.mrf.mxu0
    %v332 = vpop.f32.mrf.mxu0
    %v333 = vpop.f32.mrf.mxu0
    %334 = vdwg.mxu0
    %vm335 = vcmask 31744
    %336 = vst.msk [vmem:[%s7] sm:$0xff] %vm335, %v330
    // Predicated region
    $region38: #{dqn_forward.1} parent=1 // pred_check
      _
    $region39: #{dqn_forward.1} parent=1 // pred_check_branch
      %338 = sbr.rel (0) target = $region41
    $region40: #{dqn_forward.1} parent=1 // pred_region
      _
    $region41: #{dqn_forward.1} parent=1 // pred_fallthru
      _
    // Predicated region
    $region42: #{dqn_forward.1} parent=1 // pred_check
      _
    $region43: #{dqn_forward.1} parent=1 // pred_check_branch
      %340 = sbr.rel (0) target = $region45
    $region44: #{dqn_forward.1} parent=1 // pred_region
      _
    $region45: #{dqn_forward.1} parent=1 // pred_fallthru
      _
    %341 = vsyncpa [#allocation3], 1
    %342 = vsyncpa [#allocation5], 1

</llo_original>
